<compile_context>
chip_gen: v7x
topology: tpu7x:2x2x1
jax: 0.10.0
libtpu: 0.0.40
codegen_flags: <defaults>
</compile_context>

<pallas_src>
import functools

import jax
import jax.numpy as jnp
from jax.experimental import pallas as pl
from jax.experimental.pallas import tpu as pltpu

FEAT_DIM = 256          # stand-in backbone feature width (real efficientnet_b0: 1280)
BN_EPS = 1e-5           # PyTorch BatchNorm1d default eps
LOGIT_PAD = 128         # lane-dense logits slab width (last dim >= 128)
SENSITIVE_CATEGORIES = ('content_rating', 'nsfw_attributes', 'age_rating',
                        'clothing', 'character_pose', 'art_style')
DEEP_DIMS = (FEAT_DIM, 1024, 512, 256)   # sensitive heads
STD_DIMS = (FEAT_DIM, 512)               # standard heads

MAX_HW_TILE = 4096      # rows per backbone grid step (>=1024 hits ~85% of HBM
                        # roofline; 4096 keeps f32 temporaries well under the
                        # 32 MiB scoped-VMEM default on v7x)
HW_SPLIT = 2            # leading parallel split of HW so B=1 uses both v7x TCs
HEAD_WEIGHT_INT8 = True  # halve the head weight DMA stream (dominant at small B)


# ----------------------------- Pallas kernels -----------------------------

def _backbone_kernel(p_ref, w_ref, b_ref, o_ref, acc_ref, *,
                     hw, tile, nt2, needs_mask):
    # grid = (B, HW_SPLIT, nt2).  p: [tile, Kp] bf16, w: [Kp, F] bf16,
    # b: [1, F] f32, acc: [8, F] f32 scratch holding the partial pooled sum.
    t = pl.program_id(2)

    @pl.when(t == 0)
    def _():
        acc_ref[...] = jnp.zeros_like(acc_ref)

    h = jnp.dot(p_ref[...], w_ref[...], preferred_element_type=jnp.float32)
    h = jnp.maximum(h + b_ref[...], 0.0)                  # conv bias + ReLU (f32)
    if needs_mask:                                        # zero rows past true HW
        base = (pl.program_id(1) * nt2 + t) * tile
        row = jax.lax.broadcasted_iota(jnp.int32, h.shape, 0) + base
        h = jnp.where(row < hw, h, 0.0)
    # sublane-dense accumulate: pure VPU vreg adds, no per-step XLU reduce
    acc_ref[...] += h.reshape(tile // 8, 8, h.shape[-1]).sum(axis=0)

    @pl.when(t == nt2 - 1)
    def _():
        # single cross-sublane reduce only in the epilogue
        o_ref[0, 0] = jnp.sum(acc_ref[...], axis=0, keepdims=True)


def _head_group_kernel(f_ref, *refs):
    # One grid step == one head.  refs = (w1, s1, b1, ..., wL, sL, bL, o_ref).
    # Weights stream per head (int8 -> widened to bf16 on the VPU), activations
    # stay resident in VMEM; per-output-channel dequant scale applied to the
    # f32-accumulated matmul result, then (folded-BN) bias + ReLU.
    o_ref = refs[-1]
    wsb = refs[:-1]
    n_layers = len(wsb) // 3
    h = f_ref[...]                                        # [B, FEAT_DIM] bf16
    for i in range(n_layers):
        w, s, b = wsb[3 * i], wsb[3 * i + 1], wsb[3 * i + 2]
        y = jnp.dot(h, w[0].astype(jnp.bfloat16),
                    preferred_element_type=jnp.float32) * s[0] + b[0]
        if i + 1 < n_layers:
            h = jnp.maximum(y, 0.0).astype(jnp.bfloat16)  # hidden layer + ReLU
        else:
            o_ref[0] = y                                  # final Linear (no ReLU)


# ----------------------------- pallas_call wrappers -----------------------------

def _hw_tiling(rows):
    # Split `rows` into nt tiles of equal size, tile a multiple of 8, <= MAX_HW_TILE.
    nt = max(1, -(-rows // MAX_HW_TILE))
    tile = -(-rows // nt)
    tile = max(8, ((tile + 7) // 8) * 8)
    return tile, nt


def backbone_features(patches, conv_w, conv_b, *, hw):
    # patches: [B, HW, Kp] bf16 (3x3 im2col rows per image).
    B, HW, Kp = patches.shape
    F = conv_w.shape[1]
    hw_half = -(-hw // HW_SPLIT)
    tile, nt2 = _hw_tiling(hw_half)
    nt = HW_SPLIT * nt2
    hw_pad = nt * tile
    if hw_pad != HW:
        patches = jnp.pad(patches, ((0, 0), (0, hw_pad - HW), (0, 0)))
    p2d = patches.reshape(B * hw_pad, Kp)

    kernel = functools.partial(_backbone_kernel, hw=hw, tile=tile, nt2=nt2,
                               needs_mask=(hw_pad != hw))
    cost = pl.CostEstimate(
        flops=2 * B * hw_pad * Kp * F,
        transcendentals=0,
        bytes_accessed=(B * hw_pad * Kp * 2 + Kp * F * 2 + F * 4
                        + B * HW_SPLIT * F * 4))
    pooled_parts = pl.pallas_call(
        kernel,
        grid=(B, HW_SPLIT, nt2),
        in_specs=[
            pl.BlockSpec((tile, Kp),
                         lambda b, s, t, _nt=nt, _n2=nt2: (b * _nt + s * _n2 + t, 0)),
            pl.BlockSpec((Kp, F), lambda b, s, t: (0, 0)),
            pl.BlockSpec((1, F), lambda b, s, t: (0, 0)),
        ],
        out_specs=pl.BlockSpec((1, 1, 1, F), lambda b, s, t: (b, s, 0, 0)),
        out_shape=jax.ShapeDtypeStruct((B, HW_SPLIT, 1, F), jnp.float32),
        scratch_shapes=[pltpu.VMEM((8, F), jnp.float32)],
        compiler_params=pltpu.CompilerParams(
            dimension_semantics=("parallel", "parallel", "arbitrary")),
        cost_estimate=cost,
    )(p2d, conv_w, conv_b)
    # combine per-split partial sums + global-average-pool scale (cheap glue)
    feat = pooled_parts.reshape(B, HW_SPLIT, F).sum(axis=1) * (1.0 / float(hw))
    return feat.astype(jnp.bfloat16)


def run_head_group(feat, group):
    # group['w']: list of [N, d_in, d_out] int8/bf16; 's','b': [N, 1, d_out] f32.
    weights, scales, biases = group['w'], group['s'], group['b']
    n_heads = weights[0].shape[0]
    B, F = feat.shape
    in_specs = [pl.BlockSpec((B, F), lambda h: (0, 0))]
    operands = [feat]
    flops = 0
    bytes_acc = feat.size * 2
    for w, s, b in zip(weights, scales, biases):
        in_specs.append(pl.BlockSpec((1,) + w.shape[1:], lambda h: (h, 0, 0)))
        in_specs.append(pl.BlockSpec((1,) + s.shape[1:], lambda h: (h, 0, 0)))
        in_specs.append(pl.BlockSpec((1,) + b.shape[1:], lambda h: (h, 0, 0)))
        operands.extend([w, s, b])
        flops += 2 * B * w.shape[0] * w.shape[1] * w.shape[2]
        bytes_acc += w.size * w.dtype.itemsize + s.size * 4 + b.size * 4
    out_dim = weights[-1].shape[-1]
    bytes_acc += n_heads * B * out_dim * 4
    cost = pl.CostEstimate(flops=flops, transcendentals=0, bytes_accessed=bytes_acc)
    # TODO(synk): at large production B (>= ~256) add a batch-tile grid axis so
    # the heads flip from weight-DMA-bound to MXU-bound with a 256-row M tile.
    return pl.pallas_call(
        _head_group_kernel,
        grid=(n_heads,),
        in_specs=in_specs,
        out_specs=pl.BlockSpec((1, B, out_dim), lambda h: (h, 0, 0)),
        out_shape=jax.ShapeDtypeStruct((n_heads, B, out_dim), jnp.float32),
        compiler_params=pltpu.CompilerParams(
            dimension_semantics=("parallel",)),
        cost_estimate=cost,
    )(*operands)


# ----------------------------- parameter init -----------------------------

def _kaiming(key, fan_in, fan_out):
    # nn.init.kaiming_normal_ (fan_in mode, gain=sqrt(2)); weights stored [in, out]
    std = (2.0 / fan_in) ** 0.5
    return std * jax.random.normal(key, (fan_in, fan_out), jnp.float32)


def _fold_bn_into_linear(gamma, beta, rm, rv, w, b):
    # Module order is BatchNorm1d -> Linear (input-side fold is correct):
    #   y = ((x - rm) * gamma * rsqrt(rv + eps) + beta) @ w + b
    scale = gamma * jax.lax.rsqrt(rv + BN_EPS)           # [d_in]
    w_f = w * scale[:, None]
    b_f = b + (beta - rm * scale) @ w
    return w_f, b_f


def _head_params(key, dims, n_cls):
    keys = jax.random.split(key, len(dims))
    ws, bs = [], []
    for i, (d_in, d_out) in enumerate(zip(dims[:-1], dims[1:])):
        w = _kaiming(keys[i], d_in, d_out)
        b = jnp.zeros((d_out,), jnp.float32)
        # BN init: gamma=1, beta=0, running_mean=0, running_var=1 -> fold now.
        w, b = _fold_bn_into_linear(jnp.ones((d_in,)), jnp.zeros((d_in,)),
                                    jnp.zeros((d_in,)), jnp.ones((d_in,)), w, b)
        ws.append(w)
        bs.append(b)
    # final Linear (no BN / no activation), zero-padded to lane-dense slab width
    w = _kaiming(keys[-1], dims[-1], n_cls)
    b = jnp.zeros((n_cls,), jnp.float32)
    ws.append(jnp.zeros((dims[-1], LOGIT_PAD), jnp.float32).at[:, :n_cls].set(w))
    bs.append(jnp.zeros((LOGIT_PAD,), jnp.float32).at[:n_cls].set(b))
    return ws, bs


def _quantize_head_weights(w_stack):
    # symmetric per-output-channel int8; dequant scale applied post-matmul in-kernel
    if not HEAD_WEIGHT_INT8:
        scale = jnp.ones((w_stack.shape[0], 1, w_stack.shape[2]), jnp.float32)
        return w_stack.astype(jnp.bfloat16), scale
    amax = jnp.max(jnp.abs(w_stack), axis=1, keepdims=True)      # [N, 1, d_out]
    scale = jnp.maximum(amax, 1e-12) / 127.0
    w_q = jnp.clip(jnp.round(w_stack / scale), -127, 127).astype(jnp.int8)
    return w_q, scale.astype(jnp.float32)


def init_params(key, num_classes_dict, feat_dim=FEAT_DIM, in_channels=3):
    kconv, kheads = jax.random.split(key)

    K = in_channels * 9                      # 3x3 patches
    Kp = ((K + 31) // 32) * 32               # pad contraction dim to 32 (NOT 128)
    conv_w = jnp.zeros((Kp, feat_dim), jnp.float32).at[:K, :].set(
        _kaiming(kconv, K, feat_dim))
    params = {
        'conv_w': conv_w.astype(jnp.bfloat16),
        'conv_b': jnp.zeros((1, feat_dim), jnp.float32),
        'num_classes': dict(num_classes_dict),
    }

    deep_cats = [c for c in num_classes_dict if c in SENSITIVE_CATEGORIES]
    std_cats = [c for c in num_classes_dict if c not in SENSITIVE_CATEGORIES]
    head_keys = dict(zip(num_classes_dict,
                         jax.random.split(kheads, max(len(num_classes_dict), 1))))

    def build_group(cats, dims):
        if not cats:
            return None
        per_head = [_head_params(head_keys[c], dims, num_classes_dict[c])
                    for c in cats]
        n_layers = len(dims)                 # hidden layers + final Linear
        ws, ss, bs = [], [], []
        for l in range(n_layers):
            w_stack = jnp.stack([ph[0][l] for ph in per_head])          # [N,din,dout]
            b_stack = jnp.stack([ph[1][l] for ph in per_head])[:, None, :]
            w_q, scale = _quantize_head_weights(w_stack)
            ws.append(w_q)
            ss.append(scale)
            bs.append(b_stack)
        return {'cats': cats, 'w': ws, 's': ss, 'b': bs}

    params['deep'] = build_group(deep_cats, DEEP_DIMS)
    params['std'] = build_group(std_cats, STD_DIMS)
    return params


# ----------------------------- forward -----------------------------

def _im2col_3x3_same(x):
    # x: [B, C, H, W] NCHW -> patches [B, HW, Kp] bf16, K padded to multiple of 32
    B, C, H, W = x.shape
    xp = jnp.pad(x, ((0, 0), (0, 0), (1, 1), (1, 1)))
    shifted = [xp[:, :, dh:dh + H, dw:dw + W] for dh in range(3) for dw in range(3)]
    patches = jnp.stack(shifted, axis=2)                 # [B, C, 9, H, W]
    patches = patches.reshape(B, C * 9, H * W)
    patches = jnp.transpose(patches, (0, 2, 1))          # [B, HW, C*9]
    K = C * 9
    Kp = ((K + 31) // 32) * 32
    patches = jnp.pad(patches, ((0, 0), (0, 0), (0, Kp - K)))
    return patches.astype(jnp.bfloat16)


def robust_image_classifier_forward(params, x):
    B, C, H, W = x.shape
    patches = _im2col_3x3_same(x)                        # JAX glue (layout plumbing)
    feat = backbone_features(patches, params['conv_w'], params['conv_b'],
                             hw=H * W)                   # [B, FEAT_DIM] bf16
    outputs = {}
    for group_name in ('deep', 'std'):
        group = params[group_name]
        if group is None:
            continue
        logits = run_head_group(feat, group)             # [N, B, LOGIT_PAD] f32
        for i, cat in enumerate(group['cats']):
            n_cls = params['num_classes'][cat]
            outputs[cat] = logits[i, :, :n_cls]
    return outputs


# ----------------------------- demo -----------------------------

if __name__ == "__main__":
    num_classes_dict = {
        'content_rating': 4,   # sensitive -> deep head (1024/512/256)
        'clothing': 8,         # sensitive -> deep head
        'emotion': 5,          # standard head (512)
        'safety_tags': 6,      # standard head
    }

    key = jax.random.PRNGKey(0)
    kx, kx2, kp = jax.random.split(key, 3)

    params = init_params(kp, num_classes_dict, feat_dim=FEAT_DIM, in_channels=3)

    # main check: B=2, 16x16 image (HW divides cleanly)
    B, C, H, W = 2, 3, 16, 16
    x = jax.random.normal(kx, (B, C, H, W), jnp.float32)   # NCHW, like PyTorch
    outputs = robust_image_classifier_forward(params, x)
    outputs = jax.block_until_ready(outputs)
    for cat, n_cls in num_classes_dict.items():
        assert outputs[cat].shape == (B, n_cls), (cat, outputs[cat].shape)
        assert bool(jnp.all(jnp.isfinite(outputs[cat])))

    # second check: B=1 and HW not a multiple of 8 -> exercises the HW split
    # for dual-TC sharding and the masked padded-tail path.
    x2 = jax.random.normal(kx2, (1, 3, 10, 10), jnp.float32)
    outputs2 = robust_image_classifier_forward(params, x2)
    outputs2 = jax.block_until_ready(outputs2)
    for cat, n_cls in num_classes_dict.items():
        assert outputs2[cat].shape == (1, n_cls), (cat, outputs2[cat].shape)
        assert bool(jnp.all(jnp.isfinite(outputs2[cat])))

    print("KERNEL_OK")
</pallas_src>

<mosaic_0001>
module attributes {stable_mosaic.version = 11 : i64} {
  func.func @_backbone_kernel(%arg0: i32, %arg1: i32, %arg2: i32, %arg3: memref<128x32xbf16, #tpu.memory_space<vmem>>, %arg4: memref<32x256xbf16, #tpu.memory_space<vmem>>, %arg5: memref<1x256xf32, #tpu.memory_space<vmem>>, %arg6: memref<1x1x1x256xf32, #tpu.memory_space<vmem>>, %arg7: memref<8x256xf32, #tpu.memory_space<vmem>>) attributes {dimension_semantics = [#tpu.dimension_semantics<parallel>, #tpu.dimension_semantics<parallel>, #tpu.dimension_semantics<arbitrary>], iteration_bounds = array<i64: 2, 2, 1>, scalar_prefetch = 0 : i64, scratch_operands = 1 : i64, tpu.core_type = #tpu.core_type<tc>, window_params = [{transform_indices = @transform_0, window_bounds = array<i64: 128, 32>}, {pipeline_mode = #tpu.pipeline_mode<synchronous>, transform_indices = @transform_1, window_bounds = array<i64: 32, 256>}, {pipeline_mode = #tpu.pipeline_mode<synchronous>, transform_indices = @transform_2, window_bounds = array<i64: 1, 256>}, {transform_indices = @transform_3, window_bounds = array<i64: 1, 1, 1, 256>}]} {
    %c0_i32 = arith.constant 0 : i32
    %0 = arith.cmpi eq, %arg2, %c0_i32 : i32
    %1 = arith.extui %0 : i1 to i32
    %c0_i32_0 = arith.constant 0 : i32
    %2 = arith.cmpi ne, %1, %c0_i32_0 : i32
    scf.if %2 {
      %cst_14 = arith.constant 0.000000e+00 : f32
      %19 = vector.broadcast %cst_14 : f32 to vector<8x256xf32>
      %c0_15 = arith.constant 0 : index
      %c0_16 = arith.constant 0 : index
      %20 = vector.load %arg7[%c0_15, %c0_16] : memref<8x256xf32, #tpu.memory_space<vmem>>, vector<8x256xf32>
      tpu.vector_store %arg7[%c0_15, %c0_16], %19 {strides = array<i32>} : memref<8x256xf32, #tpu.memory_space<vmem>>, vector<8x256xf32>,
    } else {
    }
    %c0 = arith.constant 0 : index
    %c0_1 = arith.constant 0 : index
    %3 = vector.load %arg3[%c0, %c0_1] : memref<128x32xbf16, #tpu.memory_space<vmem>>, vector<128x32xbf16>
    %c0_2 = arith.constant 0 : index
    %c0_3 = arith.constant 0 : index
    %4 = vector.load %arg4[%c0_2, %c0_3] : memref<32x256xbf16, #tpu.memory_space<vmem>>, vector<32x256xbf16>
    %cst = arith.constant dense<0.000000e+00> : vector<128x256xf32>
    %5 = tpu.matmul %3, %4, %cst {dimension_numbers = #tpu.dot_dimension_numbers<[1], [0], [0], [1], [0, 0, 1, 1], [], []>} : vector<128x32xbf16>, vector<32x256xbf16>, vector<128x256xf32> -> vector<128x256xf32>
    %c0_4 = arith.constant 0 : index
    %c0_5 = arith.constant 0 : index
    %6 = vector.load %arg5[%c0_4, %c0_5] : memref<1x256xf32, #tpu.memory_space<vmem>>, vector<1x256xf32>
    %7 = vector.broadcast %6 : vector<1x256xf32> to vector<128x256xf32>
    %8 = arith.addf %5, %7 : vector<128x256xf32>
    %cst_6 = arith.constant 0.000000e+00 : f32
    %9 = vector.broadcast %cst_6 : f32 to vector<128x256xf32>
    %10 = arith.maximumf %8, %9 : vector<128x256xf32>
    %c0_7 = arith.constant 0 : index
    %c0_8 = arith.constant 0 : index
    %11 = vector.load %arg7[%c0_7, %c0_8] : memref<8x256xf32, #tpu.memory_space<vmem>>, vector<8x256xf32>
    %12 = vector.shape_cast %10 : vector<128x256xf32> to vector<16x8x256xf32>
    %cst_9 = arith.constant dense<0.000000e+00> : vector<8x256xf32>
    %13 = vector.multi_reduction <add>, %12, %cst_9 [0] : vector<16x8x256xf32> to vector<8x256xf32>
    %14 = arith.addf %11, %13 : vector<8x256xf32>
    %c0_10 = arith.constant 0 : index
    %c0_11 = arith.constant 0 : index
    %15 = vector.load %arg7[%c0_10, %c0_11] : memref<8x256xf32, #tpu.memory_space<vmem>>, vector<8x256xf32>
    tpu.vector_store %arg7[%c0_10, %c0_11], %14 {strides = array<i32>} : memref<8x256xf32, #tpu.memory_space<vmem>>, vector<8x256xf32>,
    %c0_i32_12 = arith.constant 0 : i32
    %16 = arith.cmpi eq, %arg2, %c0_i32_12 : i32
    %17 = arith.extui %16 : i1 to i32
    %c0_i32_13 = arith.constant 0 : i32
    %18 = arith.cmpi ne, %17, %c0_i32_13 : i32
    scf.if %18 {
      %c0_14 = arith.constant 0 : index
      %c0_15 = arith.constant 0 : index
      %19 = vector.load %arg7[%c0_14, %c0_15] : memref<8x256xf32, #tpu.memory_space<vmem>>, vector<8x256xf32>
      %cst_16 = arith.constant dense<0.000000e+00> : vector<256xf32>
      %20 = vector.multi_reduction <add>, %19, %cst_16 [0] : vector<8x256xf32> to vector<256xf32>
      %21 = vector.shape_cast %20 : vector<256xf32> to vector<1x256xf32>
      %c0_17 = arith.constant 0 : index
      %c0_18 = arith.constant 0 : index
      %c0_19 = arith.constant 0 : index
      %c0_20 = arith.constant 0 : index
      %22 = vector.load %arg6[%c0_17, %c0_18, %c0_19, %c0_20] : memref<1x1x1x256xf32, #tpu.memory_space<vmem>>, vector<1x1x1x256xf32>
      %23 = vector.shape_cast %22 : vector<1x1x1x256xf32> to vector<1x256xf32>
      %24 = vector.shape_cast %21 : vector<1x256xf32> to vector<1x1x1x256xf32>
      tpu.vector_store %arg6[%c0_17, %c0_18, %c0_19, %c0_20], %24 {strides = array<i32>} : memref<1x1x1x256xf32, #tpu.memory_space<vmem>>, vector<1x1x1x256xf32>,
    } else {
    }
    return
  }
  func.func @transform_0(%arg0: i32, %arg1: i32, %arg2: i32) -> (i32, i32) {
    %c2_i32 = arith.constant 2 : i32
    %0 = arith.muli %arg0, %c2_i32 : i32
    %c1_i32 = arith.constant 1 : i32
    %1 = arith.muli %arg1, %c1_i32 : i32
    %2 = arith.addi %0, %1 : i32
    %3 = arith.addi %2, %arg2 : i32
    %c0_i32 = arith.constant 0 : i32
    %c0_i32_0 = arith.constant 0 : i32
    return %3, %c0_i32 : i32, i32
  }
  func.func @transform_1(%arg0: i32, %arg1: i32, %arg2: i32) -> (i32, i32) {
    %c0_i32 = arith.constant 0 : i32
    %c0_i32_0 = arith.constant 0 : i32
    %c0_i32_1 = arith.constant 0 : i32
    return %c0_i32, %c0_i32_0 : i32, i32
  }
  func.func @transform_2(%arg0: i32, %arg1: i32, %arg2: i32) -> (i32, i32) {
    %c0_i32 = arith.constant 0 : i32
    %c0_i32_0 = arith.constant 0 : i32
    %c0_i32_1 = arith.constant 0 : i32
    return %c0_i32, %c0_i32_0 : i32, i32
  }
  func.func @transform_3(%arg0: i32, %arg1: i32, %arg2: i32) -> (i32, i32, i32, i32) {
    %c0_i32 = arith.constant 0 : i32
    %c0_i32_0 = arith.constant 0 : i32
    %c0_i32_1 = arith.constant 0 : i32
    return %arg0, %arg1, %c0_i32, %c0_i32_0 : i32, i32, i32, i32
  }
}

</mosaic_0001>

<llo_original>
// kernel: tpu_custom_call.1
$region0: #{tpu_custom_call.1}
  #allocation0 [shape = 'u32[]', space=smem, size = 0x4, offset = 0x4, fixed_abs, tag = 'smem constant byte address 0x4 - core index']
  #allocation1 [shape = 'u32[144,128]{1,0:T(1,128)}', space=vmem, size = 0x12000, scoped, tag = 'internal scratch']
  #allocation2 [shape = 'f32[8,256]{1,0:T(8,128)}', space=vmem, size = 0x2000, scoped, tag = 'scratch operand']
  %s0 = inlined_call_operand.vmem [shape: bf16[512,32], index: 0, kind: input, shape index: {}]
  %s1 = inlined_call_operand.vmem [shape: bf16[32,256], index: 1, kind: input, shape index: {}]
  %s2 = inlined_call_operand.vmem [shape: f32[1,256], index: 2, kind: input, shape index: {}]
  %s3 = inlined_call_operand.hbm [shape: f32[2,2,1,256], index: 3, kind: output, shape index: {}]
  %s4 = sld [smem:[#allocation0]]
  $region53: #{tpu_custom_call.1} parent=0
    _
  %s6 = ssub.s32 1, %s4
  %s7 = scalar_select 0, %s6, %s4
  $region1: #{tpu_custom_call.1} parent=0
    #allocation3 [shape = 'u8[2048]{0}', space=vmem, size = 0x800, scoped, tag = 'output window, operand 0']
    #allocation4 [shape = 's32[2]{0}', space=sflag, size = 0x8, scoped, tag = 'scoped memory for tpu_custom_call.1']
    %8 = vsyncpa [#allocation4], 0
    %s9 = scalar_lea.sflag [#allocation4], 1
    %10 = vsyncpa %s9, 0
    loop: start=0, step=1, limit=6
    $region2: #{tpu_custom_call.1} parent=1 // loop_pre_header
      _
    $region3: #{tpu_custom_call.1} parent=1 // loop_header
      %s12 = sphi 0, %s16
      %p13 = scmp.ge.s32.totalorder %s12, 6
      %s19 = sphi 0, %s38
      %s20 = sphi 0, %s34
      %s21 = sphi 0, %s30
      %s22 = sphi 0, %s19
      %s23 = sphi 0, %s20
      %s24 = sphi 0, %s21
      %s25 = sphi 0, %s22
      %s26 = sphi 0, %s23
      %s27 = sphi 0, %s24
      %s47 = sphi 0, %s49
      %s50 = sphi 0, %s47
      %s51 = sphi 0, %s50
      %s67 = sphi 0, %s51
      %s71 = sphi 0, %s71
      %s73 = sphi 0, %s71
      %s74 = sphi 0, %s73
      %s88 = sphi 0, %s74
      %s92 = sphi 0, %s92
      %s94 = sphi 0, %s92
      %s95 = sphi 0, %s94
      %s109 = sphi 0, %s95
      %s117 = sphi 0, %s119
      %s120 = sphi 0, %s117
      %s121 = sphi 0, %s120
      %s137 = sphi 0, %s121
    $region4: #{tpu_custom_call.1} parent=1 // loop_header_branch
      %15 = sbr.rel (%p13) target = $region8
    $region5: #{tpu_custom_call.1} parent=1 // loop_body
      %s17 = ssub.s32 %s12, 1
      %s18 = ssub.s32 %s12, 2
      %s28 = sadd.s32 1, %s21
      %p29 = scmp.ge.s32.totalorder %s28, 1
      %s30 = scalar_select %p29, 0, %s28
      %s31 = sadd.s32 1, %s20
      %s32 = scalar_select %p29, %s31, %s20
      %p33 = scmp.ge.s32.totalorder %s32, 2
      %s34 = scalar_select %p33, 0, %s32
      %s35 = sadd.s32 1, %s19
      %s36 = scalar_select %p33, %s35, %s19
      %p37 = scmp.ge.s32.totalorder %s36, 2
      %s38 = scalar_select %p37, 0, %s36
      %s39 = smul.u32 %s19, 2
      %s40 = sadd.s32 %s39, %s20
      %s41 = sadd.s32 %s40, %s21
      %s42 = smul.u32 %s38, 2
      %s43 = sadd.s32 %s42, %s34
      %s44 = sadd.s32 %s43, %s30
      %s45 = ssub.s32 %s41, %s44
      %p46 = scmp.eq.s32.totalorder %s45, 0
      %s48 = sadd.s32 %s47, 1
      %s49 = scalar_select %p46, %s47, %s48
      %p52 = pneg %p46
      %p53 = scmp.eq.s32.totalorder %s12, 3
      %p54 = por %p52, %p53
      %p55 = scmp.ne.s32.totalorder %s47, %s50
      %p56 = scmp.eq.s32.totalorder %s12, 0
      %p57 = por %p55, %p56
      %p58 = scmp.ne.s32.totalorder %s47, %s50
      %p59 = scmp.eq.s32.totalorder %s17, 3
      %p60 = por %p58, %p59
      %p61 = scmp.ne.s32.totalorder %s50, %s51
      %p62 = scmp.eq.s32.totalorder %s17, 0
      %p63 = por %p61, %p62
      %p64 = scmp.ne.s32.totalorder %s50, %s51
      %p65 = scmp.eq.s32.totalorder %s18, 3
      %p66 = por %p64, %p65
      %p68 = scmp.ne.s32.totalorder %s51, %s67
      %p69 = scmp.eq.s32.totalorder %s18, 0
      %p70 = por %p68, %p69
      %s72 = sadd.s32 %s71, 1
      %p75 = scmp.eq.s32.totalorder %s12, 3
      %p76 = scmp.ne.s32.totalorder %s71, %s73
      %p77 = scmp.eq.s32.totalorder %s12, 0
      %p78 = por %p76, %p77
      %p79 = scmp.ne.s32.totalorder %s71, %s73
      %p80 = scmp.eq.s32.totalorder %s17, 3
      %p81 = por %p79, %p80
      %p82 = scmp.ne.s32.totalorder %s73, %s74
      %p83 = scmp.eq.s32.totalorder %s17, 0
      %p84 = por %p82, %p83
      %p85 = scmp.ne.s32.totalorder %s73, %s74
      %p86 = scmp.eq.s32.totalorder %s18, 3
      %p87 = por %p85, %p86
      %p89 = scmp.ne.s32.totalorder %s74, %s88
      %p90 = scmp.eq.s32.totalorder %s18, 0
      %p91 = por %p89, %p90
      %s93 = sadd.s32 %s92, 1
      %p96 = scmp.eq.s32.totalorder %s12, 3
      %p97 = scmp.ne.s32.totalorder %s92, %s94
      %p98 = scmp.eq.s32.totalorder %s12, 0
      %p99 = por %p97, %p98
      %p100 = scmp.ne.s32.totalorder %s92, %s94
      %p101 = scmp.eq.s32.totalorder %s17, 3
      %p102 = por %p100, %p101
      %p103 = scmp.ne.s32.totalorder %s94, %s95
      %p104 = scmp.eq.s32.totalorder %s17, 0
      %p105 = por %p103, %p104
      %p106 = scmp.ne.s32.totalorder %s94, %s95
      %p107 = scmp.eq.s32.totalorder %s18, 3
      %p108 = por %p106, %p107
      %p110 = scmp.ne.s32.totalorder %s95, %s109
      %p111 = scmp.eq.s32.totalorder %s18, 0
      %p112 = por %p110, %p111
      %s113 = ssub.s32 %s19, %s38
      %s114 = ssub.s32 %s20, %s34
      %s115 = sor.u32 %s113, %s114
      %p116 = scmp.eq.s32.totalorder %s115, 0
      %s118 = sadd.s32 %s117, 1
      %s119 = scalar_select %p116, %s117, %s118
      %p122 = pneg %p116
      %p123 = scmp.eq.s32.totalorder %s12, 3
      %p124 = por %p122, %p123
      %p125 = scmp.ne.s32.totalorder %s117, %s120
      %p126 = scmp.eq.s32.totalorder %s12, 0
      %p127 = por %p125, %p126
      %p128 = scmp.ne.s32.totalorder %s117, %s120
      %p129 = scmp.eq.s32.totalorder %s17, 3
      %p130 = por %p128, %p129
      %p131 = scmp.ne.s32.totalorder %s120, %s121
      %p132 = scmp.eq.s32.totalorder %s17, 0
      %p133 = por %p131, %p132
      %p134 = scmp.ne.s32.totalorder %s120, %s121
      %p135 = scmp.eq.s32.totalorder %s18, 3
      %p136 = por %p134, %p135
      %p138 = scmp.ne.s32.totalorder %s121, %s137
      %p139 = scmp.eq.s32.totalorder %s18, 0
      %p140 = por %p138, %p139
      %p141 = scmp.le.s32.totalorder 1, %s12
      %p142 = scmp.lt.s32.totalorder %s12, 5
      %p143 = pnand %p141, %p142
      %p144 = pneg %p143
      // Predicated region
      $region9: #{tpu_custom_call.1} parent=5 // pred_check
        _
      $region10: #{tpu_custom_call.1} parent=5 // pred_check_branch
        %146 = sbr.rel (%p143) target = $region12
      $region11: #{tpu_custom_call.1} parent=5 // pred_region
        %s147 = ssub.s32 %s12, 1
        // Predicated region
        $region13: #{tpu_custom_call.1} parent=11 // pred_check
          %p148 = pneg %p84
        $region14: #{tpu_custom_call.1} parent=11 // pred_check_branch
          %150 = sbr.rel (%p148) target = $region16
        $region15: #{tpu_custom_call.1} parent=11 // pred_region
          _
        $region16: #{tpu_custom_call.1} parent=11 // pred_fallthru
          _
        // Predicated region
        $region17: #{tpu_custom_call.1} parent=11 // pred_check
          %p151 = pneg %p105
        $region18: #{tpu_custom_call.1} parent=11 // pred_check_branch
          %153 = sbr.rel (%p151) target = $region20
        $region19: #{tpu_custom_call.1} parent=11 // pred_region
          _
        $region20: #{tpu_custom_call.1} parent=11 // pred_fallthru
          _
      $region12: #{tpu_custom_call.1} parent=5 // pred_fallthru
        _
      %p154 = scmp.lt.s32.totalorder %s12, 4
      // Predicated region
      $region21: #{tpu_custom_call.1} parent=5 // pred_check
        %p155 = pneg %p154
      $region22: #{tpu_custom_call.1} parent=5 // pred_check_branch
        %157 = sbr.rel (%p155) target = $region24
      $region23: #{tpu_custom_call.1} parent=5 // pred_region
        // Predicated region
        $region25: #{tpu_custom_call.1} parent=23 // pred_check
          %p158 = pneg %p57
        $region26: #{tpu_custom_call.1} parent=23 // pred_check_branch
          %160 = sbr.rel (%p158) target = $region28
        $region27: #{tpu_custom_call.1} parent=23 // pred_region
          %s161 = smul.u32 %s19, 2
          %s162 = sadd.s32 %s161, %s20
          %s163 = sadd.s32 %s162, %s21
          %s164 = smul.u32 16, %s163
          %p165 = scmp.lt.s32.totalorder %s164, 63
          %s166 = scalar_select %p165, %s164, 63
          %s167 = smul.addr %s166, 4
          %s168 = scalar_lea.vmem %s0, %s167
          %s169 = smul.u32 %s19, 2
          %s170 = sadd.s32 %s169, %s20
          %s171 = sadd.s32 %s170, %s21
          %s172 = smul.u32 16, %s171
        $region28: #{tpu_custom_call.1} parent=23 // pred_fallthru
          _
      $region24: #{tpu_custom_call.1} parent=5 // pred_fallthru
        _
      %p173 = scmp.le.s32.totalorder 1, %s12
      %p174 = scmp.lt.s32.totalorder %s12, 5
      %p175 = pnand %p173, %p174
      %p176 = pneg %p175
      // Predicated region
      $region29: #{tpu_custom_call.1} parent=5 // pred_check
        _
      $region30: #{tpu_custom_call.1} parent=5 // pred_check_branch
        %178 = sbr.rel (%p175) target = $region32
      $region31: #{tpu_custom_call.1} parent=5 // pred_region
        %s179 = ssub.s32 %s12, 1
        %s180 = smul.u32 %s22, 2
        %s181 = sadd.s32 %s180, %s23
        %s182 = sadd.s32 %s181, %s24
        %s183 = smul.u32 16, %s182
        %p184 = scmp.lt.s32.totalorder %s183, 63
        %s185 = scalar_select %p184, %s183, 63
        %s186 = smul.addr %s185, 4
        %s187 = scalar_lea.vmem %s0, %s186
        %p188 = pneg %p63
        %p189 = pneg %p60
        %p190 = pneg %p84
        %p191 = pneg %p81
        %p192 = pneg %p105
        %p193 = pneg %p102
        %p194 = pneg %p133
        %p195 = pneg %p130
        %s196 = sand.u32 %s120, 1
        %s197 = scalar_lea.sflag [#allocation4], %s196
        %s198 = sand.u32 %s120, 1
        %s199 = smul.addr %s198, 2
        %s200 = scalar_lea.vmem [#allocation3], %s199
        %s201 = smul.u32 %s22, 2
        %s202 = sadd.s32 %s201, %s23
        %s203 = sadd.s32 %s202, %s24
        %s204 = smul.u32 16, %s203
        %p205 = scmp.lt.s32.totalorder %s204, 63
        %s206 = scalar_select %p205, %s204, 63
        %s207 = smul.addr %s206, 4
        %s208 = scalar_lea.vmem %s0, %s207
        %s209 = smul.u32 %s22, 2
        %s210 = sadd.s32 %s209, %s23
        %s211 = sadd.s32 %s210, %s24
        %s212 = smul.u32 16, %s211
        %p214 = scmp.eq.s32.totalorder %s24, 0
        // Predicated region
        $region33: #{tpu_custom_call.1} parent=31 // pred_check
          %p215 = pneg %p214
        $region34: #{tpu_custom_call.1} parent=31 // pred_check_branch
          %217 = sbr.rel (%p215) target = $region36
        $region35: #{tpu_custom_call.1} parent=31 // pred_region
          %218 = vst [vmem:[#allocation2] sm:$0xff] 0.0
          %219 = vst [vmem:[#allocation2 + $0x8] sm:$0xff] 0.0
        $region36: #{tpu_custom_call.1} parent=31 // pred_fallthru
          _
        %v220 = vld [vmem:[%s208] sm:$0xf]
        %v221 = vld [vmem:[%s208 + $0x4] sm:$0xf]
        %v222 = vld [vmem:[%s208 + $0x8] sm:$0xf]
        %v223 = vld [vmem:[%s208 + $0xc] sm:$0xf]
        %v224 = vld [vmem:[%s208 + $0x10] sm:$0xf]
        %v225 = vld [vmem:[%s208 + $0x14] sm:$0xf]
        %v226 = vld [vmem:[%s208 + $0x18] sm:$0xf]
        %v227 = vld [vmem:[%s208 + $0x1c] sm:$0xf]
        %v228 = vld [vmem:[%s208 + $0x20] sm:$0xf]
        %v229 = vld [vmem:[%s208 + $0x24] sm:$0xf]
        %v230 = vld [vmem:[%s208 + $0x28] sm:$0xf]
        %v231 = vld [vmem:[%s208 + $0x2c] sm:$0xf]
        %v232 = vld [vmem:[%s208 + $0x30] sm:$0xf]
        %v233 = vld [vmem:[%s208 + $0x34] sm:$0xf]
        %v234 = vld [vmem:[%s208 + $0x38] sm:$0xf]
        %v235 = vld [vmem:[%s208 + $0x3c] sm:$0xf]
        %v236 = vld [vmem:[%s1] sm:$0xff]
        %v237 = vld [vmem:[%s1 + $0x8] sm:$0xff]
        %v238 = vld [vmem:[%s1 + $0x10] sm:$0xff]
        %v239 = vld [vmem:[%s1 + $0x18] sm:$0xff]
        %v240 = vld [vmem:[%s2] sm:$0x3]
        %v242 = vlaneseq
        %v243 = vshrl.u32 %v242, 7
        %v244 = vsub.s32 0, %v243
        %v245 = vrot.slane %v240, %v244
        %v246 = vlaneseq
        %v247 = vshrl.u32 %v246, 7
        %v248 = vsub.s32 1, %v247
        %v249 = vrot.slane %v240, %v248
        %v268 = vunpack.c.l.b16 %v220
        %v269 = vunpack.c.l.b16 %v221
        %v270 = vunpack.c.l.b16 %v222
        %v271 = vunpack.c.l.b16 %v223
        %v272 = vunpack.c.l.b16 %v224
        %v273 = vunpack.c.l.b16 %v225
        %v274 = vunpack.c.l.b16 %v226
        %v275 = vunpack.c.l.b16 %v227
        %v276 = vunpack.c.l.b16 %v228
        %v277 = vunpack.c.l.b16 %v229
        %v278 = vunpack.c.l.b16 %v230
        %v279 = vunpack.c.l.b16 %v231
        %v280 = vunpack.c.l.b16 %v232
        %v281 = vunpack.c.l.b16 %v233
        %v282 = vunpack.c.l.b16 %v234
        %v283 = vunpack.c.l.b16 %v235
        %v284 = vpack.c.b16 %v269, %v268
        %v285 = vpack.c.b16 %v271, %v270
        %v286 = vpack.c.b16 %v273, %v272
        %v287 = vpack.c.b16 %v275, %v274
        %v288 = vpack.c.b16 %v277, %v276
        %v289 = vpack.c.b16 %v279, %v278
        %v290 = vpack.c.b16 %v281, %v280
        %v291 = vpack.c.b16 %v283, %v282
        %v296 = vunpack.c.l.b16 %v236
        %v297 = vunpack.c.h.b16 %v236
        %v298 = vunpack.c.l.b16 %v237
        %v299 = vunpack.c.h.b16 %v237
        %v300 = vunpack.c.l.b16 %v238
        %v301 = vunpack.c.h.b16 %v238
        %v302 = vunpack.c.l.b16 %v239
        %v303 = vunpack.c.h.b16 %v239
        %v304 = vpack.c.b16 %v298, %v296
        %v305 = vpack.c.b16 %v299, %v297
        %v306 = vpack.c.b16 %v302, %v300
        %v307 = vpack.c.b16 %v303, %v301
        %vm312 = vcmask 261120
        %v314 = vsel %vm312, %v284, 0
        %v317 = vsel %vm312, %v285, 0
        %v320 = vsel %vm312, %v286, 0
        %v323 = vsel %vm312, %v287, 0
        %v326 = vsel %vm312, %v288, 0
        %v329 = vsel %vm312, %v289, 0
        %v332 = vsel %vm312, %v290, 0
        %v335 = vsel %vm312, %v291, 0
        %337 = vmatprep.subr.bf16.mxu0 %v305
        %338 = vmatpush1.bf16.msra.mxu0 %v304
        %339 = vmatprep.subr.bf16.mxu0 %v307
        %340 = vmatpush1.bf16.msra.mxu0 %v306
        %341 = vmatprep.subr.bf16.mxu0 0
        %342 = vmatpush1.bf16.msra.mxu0 0
        %343 = vmatprep.subr.bf16.mxu0 0
        %344 = vmatpush1.bf16.msra.mxu0 0
        %345 = vmatprep.subr.bf16.mxu0 0
        %346 = vmatpush1.bf16.msra.mxu0 0
        %347 = vmatprep.subr.bf16.mxu0 0
        %348 = vmatpush1.bf16.msra.mxu0 0
        %349 = vmatprep.subr.bf16.mxu0 0
        %350 = vmatpush1.bf16.msra.mxu0 0
        %351 = vmatprep.subr.bf16.mxu0 0
        %352 = vmatpush1.bf16.msra.mxu0 0
        %353 = vmatprep.subr.bf16.mxu0 0
        %354 = vmatpush1.bf16.msra.mxu0 0
        %355 = vmatprep.subr.bf16.mxu0 0
        %356 = vmatpush1.bf16.msra.mxu0 0
        %357 = vmatprep.subr.bf16.mxu0 0
        %358 = vmatpush1.bf16.msra.mxu0 0
        %359 = vmatprep.subr.bf16.mxu0 0
        %360 = vmatpush1.bf16.msra.mxu0 0
        %361 = vmatprep.subr.bf16.mxu0 0
        %362 = vmatpush1.bf16.msra.mxu0 0
        %363 = vmatprep.subr.bf16.mxu0 0
        %364 = vmatpush1.bf16.msra.mxu0 0
        %365 = vmatprep.subr.bf16.mxu0 0
        %366 = vmatpush1.bf16.msra.mxu0 0
        %367 = vmatprep.subr.bf16.mxu0 0
        %368 = vmatpush1.bf16.msra.mxu0 0
        %369 = vmatprep.mubr.bf16.mxu0 0
        %370 = vmatmul.mubr.bf16.gmra.mrb[0].mxu0 %v314
        %v371 = vpop.f32.mrb[0].mxu0
        %v372 = vadd.f32 %v245, %v371
        %v373 = vpop.f32.mrb[0].mxu0
        %v374 = vadd.f32 %v249, %v373
        %v375 = vpop.f32.mrb[0].mxu0
        %v376 = vadd.f32 %v245, %v375
        %v377 = vpop.f32.mrb[0].mxu0
        %v378 = vadd.f32 %v249, %v377
        %379 = vmatprep.mubr.bf16.mxu0 0
        %380 = vmatmul.mubr.bf16.gmra.mrb[0].mxu0 %v317
        %v381 = vpop.f32.mrb[0].mxu0
        %v382 = vadd.f32 %v245, %v381
        %v383 = vpop.f32.mrb[0].mxu0
        %v384 = vadd.f32 %v249, %v383
        %v385 = vpop.f32.mrb[0].mxu0
        %v386 = vadd.f32 %v245, %v385
        %v387 = vpop.f32.mrb[0].mxu0
        %v388 = vadd.f32 %v249, %v387
        %389 = vmatprep.mubr.bf16.mxu0 0
        %390 = vmatmul.mubr.bf16.gmra.mrb[0].mxu0 %v320
        %v391 = vpop.f32.mrb[0].mxu0
        %v392 = vadd.f32 %v245, %v391
        %v393 = vpop.f32.mrb[0].mxu0
        %v394 = vadd.f32 %v249, %v393
        %v395 = vpop.f32.mrb[0].mxu0
        %v396 = vadd.f32 %v245, %v395
        %v397 = vpop.f32.mrb[0].mxu0
        %v398 = vadd.f32 %v249, %v397
        %399 = vmatprep.mubr.bf16.mxu0 0
        %400 = vmatmul.mubr.bf16.gmra.mrb[0].mxu0 %v323
        %v401 = vpop.f32.mrb[0].mxu0
        %v402 = vadd.f32 %v245, %v401
        %v403 = vpop.f32.mrb[0].mxu0
        %v404 = vadd.f32 %v249, %v403
        %v405 = vpop.f32.mrb[0].mxu0
        %v406 = vadd.f32 %v245, %v405
        %v407 = vpop.f32.mrb[0].mxu0
        %v408 = vadd.f32 %v249, %v407
        %409 = vmatprep.mubr.bf16.mxu0 0
        %410 = vmatmul.mubr.bf16.gmra.mrb[0].mxu0 %v326
        %v411 = vpop.f32.mrb[0].mxu0
        %v412 = vadd.f32 %v245, %v411
        %v413 = vpop.f32.mrb[0].mxu0
        %v414 = vadd.f32 %v249, %v413
        %v415 = vpop.f32.mrb[0].mxu0
        %v416 = vadd.f32 %v245, %v415
        %v417 = vpop.f32.mrb[0].mxu0
        %v418 = vadd.f32 %v249, %v417
        %419 = vmatprep.mubr.bf16.mxu0 0
        %420 = vmatmul.mubr.bf16.gmra.mrb[0].mxu0 %v329
        %v421 = vpop.f32.mrb[0].mxu0
        %v422 = vadd.f32 %v245, %v421
        %v423 = vpop.f32.mrb[0].mxu0
        %v424 = vadd.f32 %v249, %v423
        %v425 = vpop.f32.mrb[0].mxu0
        %v426 = vadd.f32 %v245, %v425
        %v427 = vpop.f32.mrb[0].mxu0
        %v428 = vadd.f32 %v249, %v427
        %429 = vmatprep.mubr.bf16.mxu0 0
        %430 = vmatmul.mubr.bf16.gmra.mrb[0].mxu0 %v332
        %v431 = vpop.f32.mrb[0].mxu0
        %v432 = vadd.f32 %v245, %v431
        %v433 = vpop.f32.mrb[0].mxu0
        %v434 = vadd.f32 %v249, %v433
        %v435 = vpop.f32.mrb[0].mxu0
        %v436 = vadd.f32 %v245, %v435
        %v437 = vpop.f32.mrb[0].mxu0
        %v438 = vadd.f32 %v249, %v437
        %439 = vmatprep.mubr.bf16.mxu0 0
        %440 = vmatmul.mubr.bf16.gmra.mrb[0].mxu0 %v335
        %v441 = vpop.f32.mrb[0].mxu0
        %v442 = vadd.f32 %v245, %v441
        %v443 = vpop.f32.mrb[0].mxu0
        %v444 = vadd.f32 %v249, %v443
        %v445 = vpop.f32.mrb[0].mxu0
        %v446 = vadd.f32 %v245, %v445
        %v447 = vpop.f32.mrb[0].mxu0
        %v448 = vadd.f32 %v249, %v447
        %449 = vdwg.mxu0
        %v450 = vmax.f32 %v372, 0.0
        %v451 = vmax.f32 %v374, 0.0
        %v452 = vmax.f32 %v376, 0.0
        %v453 = vmax.f32 %v378, 0.0
        %v454 = vmax.f32 %v382, 0.0
        %v455 = vmax.f32 %v384, 0.0
        %v456 = vmax.f32 %v386, 0.0
        %v457 = vmax.f32 %v388, 0.0
        %v458 = vmax.f32 %v392, 0.0
        %v459 = vmax.f32 %v394, 0.0
        %v460 = vmax.f32 %v396, 0.0
        %v461 = vmax.f32 %v398, 0.0
        %v462 = vmax.f32 %v402, 0.0
        %v463 = vmax.f32 %v404, 0.0
        %v464 = vmax.f32 %v406, 0.0
        %v465 = vmax.f32 %v408, 0.0
        %v466 = vmax.f32 %v412, 0.0
        %v467 = vmax.f32 %v414, 0.0
        %v468 = vmax.f32 %v416, 0.0
        %v469 = vmax.f32 %v418, 0.0
        %v470 = vmax.f32 %v422, 0.0
        %v471 = vmax.f32 %v424, 0.0
        %v472 = vmax.f32 %v426, 0.0
        %v473 = vmax.f32 %v428, 0.0
        %v474 = vmax.f32 %v432, 0.0
        %v475 = vmax.f32 %v434, 0.0
        %v476 = vmax.f32 %v436, 0.0
        %v477 = vmax.f32 %v438, 0.0
        %v478 = vmax.f32 %v442, 0.0
        %v479 = vmax.f32 %v444, 0.0
        %v480 = vmax.f32 %v446, 0.0
        %v481 = vmax.f32 %v448, 0.0
        %v482 = vld [vmem:[#allocation2] sm:$0xff]
        %v483 = vld [vmem:[#allocation2 + $0x8] sm:$0xff]
        %v484 = vadd.f32 %v450, %v452
        %v485 = vadd.f32 %v484, %v454
        %v486 = vadd.f32 %v485, %v456
        %v487 = vadd.f32 %v486, %v458
        %v488 = vadd.f32 %v487, %v460
        %v489 = vadd.f32 %v488, %v462
        %v490 = vadd.f32 %v489, %v464
        %v491 = vadd.f32 %v490, %v466
        %v492 = vadd.f32 %v491, %v468
        %v493 = vadd.f32 %v492, %v470
        %v494 = vadd.f32 %v493, %v472
        %v495 = vadd.f32 %v494, %v474
        %v496 = vadd.f32 %v495, %v476
        %v497 = vadd.f32 %v496, %v478
        %v498 = vadd.f32 %v497, %v480
        %v499 = vadd.f32 %v451, %v453
        %v500 = vadd.f32 %v499, %v455
        %v501 = vadd.f32 %v500, %v457
        %v502 = vadd.f32 %v501, %v459
        %v503 = vadd.f32 %v502, %v461
        %v504 = vadd.f32 %v503, %v463
        %v505 = vadd.f32 %v504, %v465
        %v506 = vadd.f32 %v505, %v467
        %v507 = vadd.f32 %v506, %v469
        %v508 = vadd.f32 %v507, %v471
        %v509 = vadd.f32 %v508, %v473
        %v510 = vadd.f32 %v509, %v475
        %v511 = vadd.f32 %v510, %v477
        %v512 = vadd.f32 %v511, %v479
        %v513 = vadd.f32 %v512, %v481
        %v514 = vadd.f32 %v482, %v498
        %v515 = vadd.f32 %v483, %v513
        %516 = vst [vmem:[#allocation2] sm:$0xff] %v514
        %517 = vst [vmem:[#allocation2 + $0x8] sm:$0xff] %v515
        // Predicated region
        $region37: #{tpu_custom_call.1} parent=31 // pred_check
          %p518 = pneg %p214
        $region38: #{tpu_custom_call.1} parent=31 // pred_check_branch
          %520 = sbr.rel (%p518) target = $region40
        $region39: #{tpu_custom_call.1} parent=31 // pred_region
          %v521 = vld [vmem:[#allocation2] sm:$0xff]
          %v522 = vld [vmem:[#allocation2 + $0x8] sm:$0xff]
          %v523 = vrot.slane %v521, 4
          %v524 = vadd.f32 %v521, %v523
          %v525 = vrot.slane %v524, 2
          %v526 = vadd.f32 %v524, %v525
          %v527 = vrot.slane %v526, 1
          %v528 = vadd.f32 %v526, %v527
          %v529 = vrot.slane %v522, 4
          %v530 = vadd.f32 %v522, %v529
          %v531 = vrot.slane %v530, 2
          %v532 = vadd.f32 %v530, %v531
          %v533 = vrot.slane %v532, 1
          %v534 = vadd.f32 %v532, %v533
          %v537 = vcombine.low %v528, %v534
          %v539 = vunpack.c.l.s4 1966171168
          %v540 = vunpack.c.0.s8 %v539
          %v541 = vlaneseq
          %v542 = vshrl.u32 %v541, 7
          %v543 = vsub.s32 %v540, %v542
          %v544 = vrot.slane %v537, %v543
          %v546 = vunpack.c.l.s4 1966171168
          %v547 = vunpack.c.0.s8 %v546
          %v548 = vlaneseq
          %v549 = vshrl.u32 %v548, 7
          %v550 = vsub.s32 %v547, %v549
          %v551 = vrot.slane %v544, %v550
          %v553 = vlaneseq
          %vm554 = vcmp.ge.s32.totalorder %v553, 0
          %vm555 = vcmp.lt.s32.totalorder %v553, 256
          %vm556 = vmand %vm554, %vm555
          %557 = vst.msk [vmem:[%s200] sm:$0x3] %vm556, %v551
        $region40: #{tpu_custom_call.1} parent=31 // pred_fallthru
          _
        %s558 = sand.u32 %s120, 1
        %s559 = scalar_lea.sflag [#allocation4], %s558
        %s560 = sand.u32 %s120, 1
        %s561 = smul.addr %s560, 2
        %s562 = scalar_lea.vmem [#allocation3], %s561
        // Predicated region
        $region41: #{tpu_custom_call.1} parent=31 // pred_check
          %p563 = pneg %p130
        $region42: #{tpu_custom_call.1} parent=31 // pred_check_branch
          %565 = sbr.rel (%p563) target = $region44
        $region43: #{tpu_custom_call.1} parent=31 // pred_region
          %s567 = ssub.s32 32, 32
          %568 = vsyncadd %s559, %s567
          %s569 = smul.addr %s23, 2
          %s570 = smul.addr %s22, 4
          %s571 = sadd.s32 %s569, %s570
          %s572 = smul.addr %s571, 16
          %s573 = scalar_lea.hbm %s3, %s572
          %s575 = sshll.u32 %s562, 4
          %s576 = int_to_ptr.vmem [resolvable:$true] %s575
          %578 = dma.vmem_to_hbm [thread:$0]  %s576, 32, %s573, %s559
        $region44: #{tpu_custom_call.1} parent=31 // pred_fallthru
          _
      $region32: #{tpu_custom_call.1} parent=5 // pred_fallthru
        _
      %p579 = scmp.le.s32.totalorder 2, %s12
      // Predicated region
      $region45: #{tpu_custom_call.1} parent=5 // pred_check
        %p580 = pneg %p579
      $region46: #{tpu_custom_call.1} parent=5 // pred_check_branch
        %582 = sbr.rel (%p580) target = $region48
      $region47: #{tpu_custom_call.1} parent=5 // pred_region
        %s583 = ssub.s32 %s12, 2
        // Predicated region
        $region49: #{tpu_custom_call.1} parent=47 // pred_check
          %p584 = pneg %p136
        $region50: #{tpu_custom_call.1} parent=47 // pred_check_branch
          %586 = sbr.rel (%p584) target = $region52
        $region51: #{tpu_custom_call.1} parent=47 // pred_region
          %s587 = sand.u32 %s121, 1
          %s588 = scalar_lea.sflag [#allocation4], %s587
          %s589 = sand.u32 %s121, 1
          %s590 = smul.addr %s589, 2
          %s591 = scalar_lea.vmem [#allocation3], %s590
          %592 = dma.done %s588, 32
        $region52: #{tpu_custom_call.1} parent=47 // pred_fallthru
          _
      $region48: #{tpu_custom_call.1} parent=5 // pred_fallthru
        _
    $region6: #{tpu_custom_call.1} parent=1 // loop_footer
      %s16 = sadd.s32 1, %s12
    $region7: #{tpu_custom_call.1} parent=1 // loop_footer_branch
      %11 = sbr.rel target = $region3
    $region8: #{tpu_custom_call.1} parent=1 // loop_exit
      _
    %593 = vsyncpa [#allocation4], 1
    %s594 = scalar_lea.sflag [#allocation4], 1
    %595 = vsyncpa %s594, 1

</llo_original>
